<compile_context>
chip_gen: v5e
topology: v5e:2x2
jax: 0.10.0
libtpu: 0.0.40
codegen_flags: <defaults>
</compile_context>

<pallas_src>
import math
import jax
import jax.numpy as jnp
from jax import lax
from jax.experimental import pallas as pl
from jax.experimental.pallas import tpu as pltpu

# --- module hyper-parameters (Conv2dShiftQ defaults) -------------------------
WEIGHT_BITS = 5
ACT_INT_BITS = 16
ACT_FRAC_BITS = 16
SHIFT_MIN = -(2 ** (WEIGHT_BITS - 1) - 1)          # -15
CLAMP_MIN = 2.0 ** SHIFT_MIN                        # 2**-15
CLAMP_MAX = 2.0 ** 0                                # 1.0
FP_DELTA = 2.0 ** (-ACT_FRAC_BITS)
FP_BOUND = 2.0 ** (ACT_INT_BITS - 1)


# --- quantization helpers (used in wrapper/kernel and in the reference) ------
def _round_fixed_point(x):
    # DeepShift ste.round_to_fixed: floor(x/delta)*delta, clamp to [-2^15, 2^15-1]
    return jnp.clip(jnp.floor(x * (1.0 / FP_DELTA)) * FP_DELTA, -FP_BOUND, FP_BOUND - 1.0)


def _clampabs(w):
    # ste.clampabs: clamp |w| into [CLAMP_MIN, CLAMP_MAX], zeros stay zero
    w = jnp.where(w > CLAMP_MAX, CLAMP_MAX, w)
    w = jnp.where(w < -CLAMP_MAX, -CLAMP_MAX, w)
    w = jnp.where((w > 0) & (w < CLAMP_MIN), CLAMP_MIN, w)
    w = jnp.where((w < 0) & (w > -CLAMP_MIN), -CLAMP_MIN, w)
    return w


def _round_power_of_2(w):
    # sign(w) * 2**round(log2(|w|))   (deterministic, round-half-to-even)
    sign = jnp.sign(w)
    wabs = jnp.abs(w)
    shift = jnp.round(jnp.log2(jnp.where(wabs > 0, wabs, 1.0)))
    return jnp.where(sign == 0.0, 0.0, sign * jnp.exp2(shift))


def _round_up(v, m):
    return ((v + m - 1) // m) * m


# --- forward: implicit-im2col Pallas conv ------------------------------------
def conv2d_shift_q(x, weight, bias=None, stride=(1, 1), padding=(0, 0),
                   dilation=(1, 1), groups=1, target_m=512,
                   vmem_budget=24 * 1024 * 1024):
    """x: (N, Cin, H, W) f32, weight: (Cout, Cin, KH, KW), bias: (Cout,) or None."""
    assert groups == 1  # TODO(synk): grouped convolution not implemented in this kernel
    # TODO(synk): padding_mode='circular' path of the module is not implemented (zeros only)
    N, Cin, H, W = x.shape
    Cout, _, KH, KW = weight.shape
    sh, sw = stride
    ph, pw = padding
    dh, dw = dilation

    Hp, Wp = H + 2 * ph, W + 2 * pw
    Ho = (Hp - dh * (KH - 1) - 1) // sh + 1
    Wo = (Wp - dw * (KW - 1) - 1) // sw + 1
    K = KH * KW * Cin

    # --- grid-invariant quantization hoisted out of the kernel ---------------
    wq = _round_power_of_2(_clampabs(weight.astype(jnp.float32)))
    bq = (jnp.zeros((Cout,), jnp.float32) if bias is None
          else _round_fixed_point(bias.astype(jnp.float32)))

    # --- weights as LHS (Cout_p, K); K ordered (kh, kw, ci) -------------------
    Cout_p = _round_up(max(Cout, 1), 8)              # sublane granule only, not 128
    w_lhs = jnp.transpose(wq, (0, 2, 3, 1)).reshape(Cout, K)
    w_lhs = jnp.pad(w_lhs, ((0, Cout_p - Cout), (0, 0)))
    b_col = jnp.pad(bq.reshape(Cout, 1), ((0, Cout_p - Cout), (0, 0)))

    if Cout_p <= 256:
        TCO = Cout_p
    elif Cout_p % 256 == 0:
        TCO = 256                                    # NOTE: 128 is equally good on v5e
    elif Cout_p % 128 == 0:
        TCO = 128
    else:
        TCO = Cout_p
    n_co = Cout_p // TCO

    fast = (sh == 1 and sw == 1)                     # contiguous-slice window path
    W_tot = max(Wp, Wo * sw + (KW - 1) * dw)         # slab width (>= padded width)
    Wcols = W_tot if fast else Wo                    # output columns per row tile

    # --- row tiling: choose TH from a per-step VMEM footprint -----------------
    def step_bytes(th):
        th_in = th * sh + (KH - 1) * dh
        m = th * Wcols
        if fast:
            s_pad = _round_up(th_in * W_tot + (KW - 1) * dw, 128)
            slab_b = Cin * s_pad * 4
        else:
            slab_b = Cin * th_in * W_tot * 4
        return (2 * slab_b + slab_b                  # double-buffered slab + xq copy
                + 2 * K * m * 4                      # patch scratch (+ transient)
                + 2 * TCO * m * 4                    # double-buffered output block
                + 2 * TCO * K * 4 + 2 * TCO * 4)     # weights + bias

    TH = min(Ho, max(1, target_m // max(Wcols, 1)))
    while TH > 1 and step_bytes(TH) > vmem_budget:
        TH = max(1, TH // 2)
    n_h = -(-Ho // TH)
    Ho_pad = n_h * TH
    G = N * n_h
    TH_in = TH * sh + (KH - 1) * dh
    H_tot = max(Hp, Ho_pad * sh + (KH - 1) * dh)
    M = TH * Wcols

    if fast:
        S = TH_in * W_tot
        S_pad = _round_up(S + (KW - 1) * dw, 128)    # tail pad keeps tap slices in-bounds
        slab_block_bytes = Cin * S_pad * 4
    else:
        S = S_pad = None
        slab_block_bytes = Cin * TH_in * W_tot * 4
    w_block_bytes = TCO * K * 4

    # --- grid-axis order: keep the larger operand resident across inner axis --
    if w_block_bytes > slab_block_bytes:
        grid = (n_co, G)
        _g = lambda a, b: b
        _j = lambda a, b: a
    else:
        grid = (G, n_co)
        _g = lambda a, b: a
        _j = lambda a, b: b

    # --- slab construction: NCHW-native, pad + (halo) stack, no transpose -----
    xp = jnp.pad(x.astype(jnp.float32),
                 ((0, 0), (0, 0), (ph, ph + (H_tot - Hp)), (pw, pw + (W_tot - Wp))))
    slabs = jnp.stack([xp[:, :, i * TH * sh: i * TH * sh + TH_in, :]
                       for i in range(n_h)], axis=1)         # (N, n_h, Cin, TH_in, W_tot)
    slabs = slabs.reshape(G, Cin, TH_in, W_tot)
    if fast:
        slabs = jnp.pad(slabs.reshape(G, Cin, S), ((0, 0), (0, 0), (0, S_pad - S)))
        x_block = (1, Cin, S_pad)
        x_index = lambda a, b: (_g(a, b), 0, 0)
    else:
        x_block = (1, Cin, TH_in, W_tot)
        x_index = lambda a, b: (_g(a, b), 0, 0, 0)

    def kernel(x_ref, w_ref, b_ref, o_ref, patch_ref):
        # x_ref     : (1, Cin, S_pad) or (1, Cin, TH_in, W_tot)  raw input slab
        # w_ref     : (TCO, K)   pre-quantized power-of-2 weights (LHS)
        # b_ref     : (TCO, 1)   pre-quantized bias
        # o_ref     : (1, TCO, M)
        # patch_ref : (K, M)     implicit-im2col patch (VMEM scratch)
        xq = _round_fixed_point(x_ref[0])            # activation quant on ~1x data
        for kh in range(KH):
            for kw in range(KW):
                t = kh * KW + kw
                if fast:
                    # stride 1: each window is a contiguous slice of the
                    # flattened (row-major) spatial axis; cols >= Wo are
                    # garbage and sliced off in the wrapper.
                    off = kh * dh * W_tot + kw * dw
                    patch_ref[t * Cin:(t + 1) * Cin, :] = xq[:, off:off + M]
                else:
                    # general stride path (reshape-based decimation per tap).
                    # TODO(synk): phase-split the decimation once per (sh, sw)
                    # phase instead of per tap for strided convs.
                    win = xq[:, kh * dh: kh * dh + TH * sh,
                             kw * dw: kw * dw + Wo * sw]
                    win = win.reshape(Cin, TH, sh, Wo, sw)[:, :, 0, :, 0]
                    patch_ref[t * Cin:(t + 1) * Cin, :] = win.reshape(Cin, M)
        # single MXU matmul per grid step: (TCO, K) @ (K, M) -> (TCO, M)
        o_ref[0] = (jnp.dot(w_ref[...], patch_ref[...],
                            preferred_element_type=jnp.float32) + b_ref[...])

    flops = 2 * G * Cout_p * M * K
    bytes_accessed = int(4 * (slabs.size + w_lhs.size + b_col.size) + 4 * G * Cout_p * M)
    vmem_limit = int(min(44 * 1024 * 1024, max(16 * 1024 * 1024, 2 * step_bytes(TH))))

    out = pl.pallas_call(
        kernel,
        out_shape=jax.ShapeDtypeStruct((G, Cout_p, M), jnp.float32),
        grid=grid,
        in_specs=[
            pl.BlockSpec(x_block, x_index),
            pl.BlockSpec((TCO, K), lambda a, b: (_j(a, b), 0)),
            pl.BlockSpec((TCO, 1), lambda a, b: (_j(a, b), 0)),
        ],
        out_specs=pl.BlockSpec((1, TCO, M), lambda a, b: (_g(a, b), _j(a, b), 0)),
        scratch_shapes=[pltpu.VMEM((K, M), jnp.float32)],
        compiler_params=pltpu.CompilerParams(
            dimension_semantics=("parallel", "parallel"),
            vmem_limit_bytes=vmem_limit,
        ),
        cost_estimate=pl.CostEstimate(
            flops=flops, transcendentals=0, bytes_accessed=bytes_accessed),
    )(slabs, w_lhs, b_col)

    # --- back to NCHW: slice off padded channels / garbage cols / pad rows ----
    out = out.reshape(N, n_h, Cout_p, TH, Wcols)[:, :, :Cout, :, :Wo]
    if n_h == 1:
        out = out[:, 0, :, :Ho, :]                   # already NCHW, no transpose
    else:
        out = jnp.transpose(out, (0, 2, 1, 3, 4)).reshape(N, Cout, Ho_pad, Wo)[:, :, :Ho, :]
    return out


if __name__ == "__main__":
    # small, deterministic configuration
    N, Cin, H, W = 2, 4, 16, 16
    Cout, KH, KW = 8, 3, 3
    stride, padding, dilation = (1, 1), (1, 1), (1, 1)

    key = jax.random.PRNGKey(0)
    kx, kw, kb = jax.random.split(key, 3)

    x = jax.random.normal(kx, (N, Cin, H, W), dtype=jnp.float32)

    # kaiming_uniform_(a=sqrt(5)) -> uniform(-gain*sqrt(3/fan_in), +...)
    fan_in = Cin * KH * KW
    gain = math.sqrt(2.0 / (1.0 + 5.0))
    w_bound = gain * math.sqrt(3.0 / fan_in)
    weight = jax.random.uniform(kw, (Cout, Cin, KH, KW), dtype=jnp.float32,
                                minval=-w_bound, maxval=w_bound)
    b_bound = 1.0 / math.sqrt(fan_in)
    bias = jax.random.uniform(kb, (Cout,), dtype=jnp.float32,
                              minval=-b_bound, maxval=b_bound)

    out = conv2d_shift_q(x, weight, bias, stride=stride, padding=padding,
                         dilation=dilation)
    out = jax.block_until_ready(out)

    # pure-JAX reference (same quantization, XLA conv) for a sanity check
    xq = _round_fixed_point(x)
    wq = _round_power_of_2(_clampabs(weight))
    bq = _round_fixed_point(bias)
    ref = lax.conv_general_dilated(
        xq, wq, window_strides=stride,
        padding=[(padding[0], padding[0]), (padding[1], padding[1])],
        rhs_dilation=dilation, dimension_numbers=("NCHW", "OIHW", "NCHW"),
        precision=lax.Precision.HIGHEST,
    ) + bq.reshape(1, -1, 1, 1)

    assert out.shape == (N, Cout, H, W), out.shape
    # tolerance scaled to output magnitude (kernel MXU matmul vs HIGHEST-precision
    # XLA conv; see review note on matmul precision)
    tol = 1e-3 * max(1.0, float(jnp.max(jnp.abs(ref))))
    max_err = float(jnp.max(jnp.abs(out - ref)))
    assert max_err < tol, f"mismatch vs reference: {max_err} (tol {tol})"
    print("KERNEL_OK")
</pallas_src>

<mosaic_0001>
module attributes {stable_mosaic.version = 11 : i64} {
  func.func @kernel(%arg0: i32, %arg1: i32, %arg2: memref<1x4x384xf32, #tpu.memory_space<vmem>>, %arg3: memref<8x36xf32, #tpu.memory_space<vmem>>, %arg4: memref<8x1xf32, #tpu.memory_space<vmem>>, %arg5: memref<1x8x288xf32, #tpu.memory_space<vmem>>, %arg6: memref<36x288xf32, #tpu.memory_space<vmem>>) attributes {dimension_semantics = [#tpu.dimension_semantics<parallel>, #tpu.dimension_semantics<parallel>], iteration_bounds = array<i64: 2, 1>, scalar_prefetch = 0 : i64, scratch_operands = 1 : i64, tpu.core_type = #tpu.core_type<tc>, window_params = [{transform_indices = @transform_0, window_bounds = array<i64: 1, 4, 384>}, {transform_indices = @transform_1, window_bounds = array<i64: 8, 36>}, {transform_indices = @transform_2, window_bounds = array<i64: 8, 1>}, {transform_indices = @transform_3, window_bounds = array<i64: 1, 8, 288>}]} {
    %c0 = arith.constant 0 : index
    %c0_0 = arith.constant 0 : index
    %c0_1 = arith.constant 0 : index
    %0 = vector.load %arg2[%c0, %c0_0, %c0_1] : memref<1x4x384xf32, #tpu.memory_space<vmem>>, vector<1x4x384xf32>
    %1 = vector.shape_cast %0 : vector<1x4x384xf32> to vector<4x384xf32>
    %cst = arith.constant 6.553600e+04 : f32
    %2 = vector.broadcast %cst : f32 to vector<4x384xf32>
    %3 = arith.mulf %1, %2 : vector<4x384xf32>
    %4 = math.floor %3 : vector<4x384xf32>
    %cst_2 = arith.constant 1.52587891E-5 : f32
    %5 = vector.broadcast %cst_2 : f32 to vector<4x384xf32>
    %6 = arith.mulf %4, %5 : vector<4x384xf32>
    %cst_3 = arith.constant -3.276800e+04 : f32
    %cst_4 = arith.constant 3.276700e+04 : f32
    %7 = vector.broadcast %cst_3 : f32 to vector<4x384xf32>
    %8 = arith.maximumf %7, %6 : vector<4x384xf32>
    %9 = vector.broadcast %cst_4 : f32 to vector<4x384xf32>
    %10 = arith.minimumf %9, %8 : vector<4x384xf32>
    %11 = vector.extract_strided_slice %10 {offsets = [0, 0], sizes = [4, 288], strides = [1, 1]} : vector<4x384xf32> to vector<4x288xf32>
    %c0_5 = arith.constant 0 : index
    %c0_6 = arith.constant 0 : index
    %12 = vector.load %arg6[%c0_5, %c0_6] : memref<36x288xf32, #tpu.memory_space<vmem>>, vector<4x288xf32>
    tpu.vector_store %arg6[%c0_5, %c0_6], %11 {strides = array<i32>} : memref<36x288xf32, #tpu.memory_space<vmem>>, vector<4x288xf32>,
    %13 = vector.extract_strided_slice %10 {offsets = [0, 1], sizes = [4, 288], strides = [1, 1]} : vector<4x384xf32> to vector<4x288xf32>
    %c4 = arith.constant 4 : index
    %c0_7 = arith.constant 0 : index
    %14 = vector.load %arg6[%c4, %c0_7] : memref<36x288xf32, #tpu.memory_space<vmem>>, vector<4x288xf32>
    tpu.vector_store %arg6[%c4, %c0_7], %13 {strides = array<i32>} : memref<36x288xf32, #tpu.memory_space<vmem>>, vector<4x288xf32>,
    %15 = vector.extract_strided_slice %10 {offsets = [0, 2], sizes = [4, 288], strides = [1, 1]} : vector<4x384xf32> to vector<4x288xf32>
    %c8 = arith.constant 8 : index
    %c0_8 = arith.constant 0 : index
    %16 = vector.load %arg6[%c8, %c0_8] : memref<36x288xf32, #tpu.memory_space<vmem>>, vector<4x288xf32>
    tpu.vector_store %arg6[%c8, %c0_8], %15 {strides = array<i32>} : memref<36x288xf32, #tpu.memory_space<vmem>>, vector<4x288xf32>,
    %17 = vector.extract_strided_slice %10 {offsets = [0, 18], sizes = [4, 288], strides = [1, 1]} : vector<4x384xf32> to vector<4x288xf32>
    %c12 = arith.constant 12 : index
    %c0_9 = arith.constant 0 : index
    %18 = vector.load %arg6[%c12, %c0_9] : memref<36x288xf32, #tpu.memory_space<vmem>>, vector<4x288xf32>
    tpu.vector_store %arg6[%c12, %c0_9], %17 {strides = array<i32>} : memref<36x288xf32, #tpu.memory_space<vmem>>, vector<4x288xf32>,
    %19 = vector.extract_strided_slice %10 {offsets = [0, 19], sizes = [4, 288], strides = [1, 1]} : vector<4x384xf32> to vector<4x288xf32>
    %c16 = arith.constant 16 : index
    %c0_10 = arith.constant 0 : index
    %20 = vector.load %arg6[%c16, %c0_10] : memref<36x288xf32, #tpu.memory_space<vmem>>, vector<4x288xf32>
    tpu.vector_store %arg6[%c16, %c0_10], %19 {strides = array<i32>} : memref<36x288xf32, #tpu.memory_space<vmem>>, vector<4x288xf32>,
    %21 = vector.extract_strided_slice %10 {offsets = [0, 20], sizes = [4, 288], strides = [1, 1]} : vector<4x384xf32> to vector<4x288xf32>
    %c20 = arith.constant 20 : index
    %c0_11 = arith.constant 0 : index
    %22 = vector.load %arg6[%c20, %c0_11] : memref<36x288xf32, #tpu.memory_space<vmem>>, vector<4x288xf32>
    tpu.vector_store %arg6[%c20, %c0_11], %21 {strides = array<i32>} : memref<36x288xf32, #tpu.memory_space<vmem>>, vector<4x288xf32>,
    %23 = vector.extract_strided_slice %10 {offsets = [0, 36], sizes = [4, 288], strides = [1, 1]} : vector<4x384xf32> to vector<4x288xf32>
    %c24 = arith.constant 24 : index
    %c0_12 = arith.constant 0 : index
    %24 = vector.load %arg6[%c24, %c0_12] : memref<36x288xf32, #tpu.memory_space<vmem>>, vector<4x288xf32>
    tpu.vector_store %arg6[%c24, %c0_12], %23 {strides = array<i32>} : memref<36x288xf32, #tpu.memory_space<vmem>>, vector<4x288xf32>,
    %25 = vector.extract_strided_slice %10 {offsets = [0, 37], sizes = [4, 288], strides = [1, 1]} : vector<4x384xf32> to vector<4x288xf32>
    %c28 = arith.constant 28 : index
    %c0_13 = arith.constant 0 : index
    %26 = vector.load %arg6[%c28, %c0_13] : memref<36x288xf32, #tpu.memory_space<vmem>>, vector<4x288xf32>
    tpu.vector_store %arg6[%c28, %c0_13], %25 {strides = array<i32>} : memref<36x288xf32, #tpu.memory_space<vmem>>, vector<4x288xf32>,
    %27 = vector.extract_strided_slice %10 {offsets = [0, 38], sizes = [4, 288], strides = [1, 1]} : vector<4x384xf32> to vector<4x288xf32>
    %c32 = arith.constant 32 : index
    %c0_14 = arith.constant 0 : index
    %28 = vector.load %arg6[%c32, %c0_14] : memref<36x288xf32, #tpu.memory_space<vmem>>, vector<4x288xf32>
    tpu.vector_store %arg6[%c32, %c0_14], %27 {strides = array<i32>} : memref<36x288xf32, #tpu.memory_space<vmem>>, vector<4x288xf32>,
    %c0_15 = arith.constant 0 : index
    %c0_16 = arith.constant 0 : index
    %29 = vector.load %arg3[%c0_15, %c0_16] : memref<8x36xf32, #tpu.memory_space<vmem>>, vector<8x36xf32>
    %c0_17 = arith.constant 0 : index
    %c0_18 = arith.constant 0 : index
    %30 = vector.load %arg6[%c0_17, %c0_18] : memref<36x288xf32, #tpu.memory_space<vmem>>, vector<36x288xf32>
    %cst_19 = arith.constant dense<0.000000e+00> : vector<8x288xf32>
    %31 = tpu.matmul %29, %30, %cst_19 {dimension_numbers = #tpu.dot_dimension_numbers<[1], [0], [0], [1], [0, 0, 1, 1], [], []>} : vector<8x36xf32>, vector<36x288xf32>, vector<8x288xf32> -> vector<8x288xf32>
    %c0_20 = arith.constant 0 : index
    %c0_21 = arith.constant 0 : index
    %32 = vector.load %arg4[%c0_20, %c0_21] : memref<8x1xf32, #tpu.memory_space<vmem>>, vector<8x1xf32>
    %33 = vector.broadcast %32 : vector<8x1xf32> to vector<8x288xf32>
    %34 = arith.addf %31, %33 : vector<8x288xf32>
    %c0_22 = arith.constant 0 : index
    %c0_23 = arith.constant 0 : index
    %c0_24 = arith.constant 0 : index
    %35 = vector.load %arg5[%c0_22, %c0_23, %c0_24] : memref<1x8x288xf32, #tpu.memory_space<vmem>>, vector<1x8x288xf32>
    %36 = vector.shape_cast %35 : vector<1x8x288xf32> to vector<8x288xf32>
    %37 = vector.shape_cast %34 : vector<8x288xf32> to vector<1x8x288xf32>
    tpu.vector_store %arg5[%c0_22, %c0_23, %c0_24], %37 {strides = array<i32>} : memref<1x8x288xf32, #tpu.memory_space<vmem>>, vector<1x8x288xf32>,
    return
  }
  func.func @transform_0(%arg0: i32, %arg1: i32) -> (i32, i32, i32) {
    %c0_i32 = arith.constant 0 : i32
    %c0_i32_0 = arith.constant 0 : i32
    %c0_i32_1 = arith.constant 0 : i32
    return %arg0, %c0_i32, %c0_i32_0 : i32, i32, i32
  }
  func.func @transform_1(%arg0: i32, %arg1: i32) -> (i32, i32) {
    %c0_i32 = arith.constant 0 : i32
    %c0_i32_0 = arith.constant 0 : i32
    return %arg1, %c0_i32 : i32, i32
  }
  func.func @transform_2(%arg0: i32, %arg1: i32) -> (i32, i32) {
    %c0_i32 = arith.constant 0 : i32
    %c0_i32_0 = arith.constant 0 : i32
    return %arg1, %c0_i32 : i32, i32
  }
  func.func @transform_3(%arg0: i32, %arg1: i32) -> (i32, i32, i32) {
    %c0_i32 = arith.constant 0 : i32
    %c0_i32_0 = arith.constant 0 : i32
    return %arg0, %arg1, %c0_i32 : i32, i32, i32
  }
}

</mosaic_0001>

<llo_original>
// kernel: tpu_custom_call.1
$region0: #{tpu_custom_call.1}
  #allocation0 [shape = 'u32[]', space=smem, size = 0x4, offset = 0x4, fixed_abs, tag = 'smem constant byte address 0x4 - core index']
  #allocation1 [shape = 'u32[72,128]{1,0:T(1,128)}', space=vmem, size = 0x9000, scoped, tag = 'internal scratch']
  #allocation2 [shape = 'f32[36,288]{1,0:T(8,128)}', space=vmem, size = 0xf000, scoped, tag = 'scratch operand']
  %s0 = inlined_call_operand.hbm [shape: f32[2,4,384], index: 0, kind: input, shape index: {}]
  %s1 = inlined_call_operand.vmem [shape: f32[8,36], index: 1, kind: input, shape index: {}]
  %s2 = inlined_call_operand.vmem [shape: f32[8,1], index: 2, kind: input, shape index: {}]
  %s3 = inlined_call_operand.hbm [shape: f32[2,8,288], index: 3, kind: output, shape index: {}]
  %s4 = sld [smem:[#allocation0]]
  $region49: #{tpu_custom_call.1} parent=0
    _
  %s6 = ssub.s32 1, %s4
  %s7 = scalar_select 0, %s6, %s4
  $region1: #{tpu_custom_call.1} parent=0
    #allocation3 [shape = 'u8[12288]{0}', space=vmem, size = 0x3000, scoped, tag = 'input window, operand 0']
    #allocation4 [shape = 's32[2]{0}', space=sflag, size = 0x8, scoped, tag = 'scoped memory for tpu_custom_call.1']
    #allocation5 [shape = 's32[2]{0}', space=sflag, size = 0x8, scoped, tag = 'scoped memory for tpu_custom_call.1']
    #allocation6 [shape = 'u8[24576]{0}', space=vmem, size = 0x6000, scoped, tag = 'output window, operand 0']
    %8 = vsyncpa [#allocation4], 0
    %s9 = scalar_lea.sflag [#allocation4], 1
    %10 = vsyncpa %s9, 0
    %11 = vsyncpa [#allocation5], 0
    %s12 = scalar_lea.sflag [#allocation5], 1
    %13 = vsyncpa %s12, 0
    loop: start=0, step=1, limit=4
    $region2: #{tpu_custom_call.1} parent=1 // loop_pre_header
      _
    $region3: #{tpu_custom_call.1} parent=1 // loop_header
      %s15 = sphi 0, %s19
      %p16 = scmp.ge.s32.totalorder %s15, 4
      %s22 = sphi 0, %s34
      %s23 = sphi 0, %s30
      %s24 = sphi 0, %s22
      %s25 = sphi 0, %s23
      %s26 = sphi 0, %s24
      %s27 = sphi 0, %s25
      %s37 = sphi 0, %s39
      %s40 = sphi 0, %s37
      %s41 = sphi 0, %s40
      %s57 = sphi 0, %s41
      %s63 = sphi 0, %s65
      %s66 = sphi 0, %s63
      %s67 = sphi 0, %s66
      %s83 = sphi 0, %s67
      %s89 = sphi 0, %s91
      %s92 = sphi 0, %s89
      %s93 = sphi 0, %s92
      %s109 = sphi 0, %s93
      %s117 = sphi 0, %s119
      %s120 = sphi 0, %s117
      %s121 = sphi 0, %s120
      %s137 = sphi 0, %s121
    $region4: #{tpu_custom_call.1} parent=1 // loop_header_branch
      %18 = sbr.rel (%p16) target = $region8
    $region5: #{tpu_custom_call.1} parent=1 // loop_body
      %s20 = ssub.s32 %s15, 1
      %s21 = ssub.s32 %s15, 2
      %s28 = sadd.s32 1, %s23
      %p29 = scmp.ge.s32.totalorder %s28, 1
      %s30 = scalar_select %p29, 0, %s28
      %s31 = sadd.s32 1, %s22
      %s32 = scalar_select %p29, %s31, %s22
      %p33 = scmp.ge.s32.totalorder %s32, 2
      %s34 = scalar_select %p33, 0, %s32
      %s35 = ssub.s32 %s22, %s34
      %p36 = scmp.eq.s32.totalorder %s35, 0
      %s38 = sadd.s32 %s37, 1
      %s39 = scalar_select %p36, %s37, %s38
      %p42 = pneg %p36
      %p43 = scmp.eq.s32.totalorder %s15, 1
      %p44 = por %p42, %p43
      %p45 = scmp.ne.s32.totalorder %s37, %s40
      %p46 = scmp.eq.s32.totalorder %s15, 0
      %p47 = por %p45, %p46
      %p48 = scmp.ne.s32.totalorder %s37, %s40
      %p49 = scmp.eq.s32.totalorder %s20, 1
      %p50 = por %p48, %p49
      %p51 = scmp.ne.s32.totalorder %s40, %s41
      %p52 = scmp.eq.s32.totalorder %s20, 0
      %p53 = por %p51, %p52
      %p54 = scmp.ne.s32.totalorder %s40, %s41
      %p55 = scmp.eq.s32.totalorder %s21, 1
      %p56 = por %p54, %p55
      %p58 = scmp.ne.s32.totalorder %s41, %s57
      %p59 = scmp.eq.s32.totalorder %s21, 0
      %p60 = por %p58, %p59
      %s61 = ssub.s32 %s23, %s30
      %p62 = scmp.eq.s32.totalorder %s61, 0
      %s64 = sadd.s32 %s63, 1
      %s65 = scalar_select %p62, %s63, %s64
      %p68 = pneg %p62
      %p69 = scmp.eq.s32.totalorder %s15, 1
      %p70 = por %p68, %p69
      %p71 = scmp.ne.s32.totalorder %s63, %s66
      %p72 = scmp.eq.s32.totalorder %s15, 0
      %p73 = por %p71, %p72
      %p74 = scmp.ne.s32.totalorder %s63, %s66
      %p75 = scmp.eq.s32.totalorder %s20, 1
      %p76 = por %p74, %p75
      %p77 = scmp.ne.s32.totalorder %s66, %s67
      %p78 = scmp.eq.s32.totalorder %s20, 0
      %p79 = por %p77, %p78
      %p80 = scmp.ne.s32.totalorder %s66, %s67
      %p81 = scmp.eq.s32.totalorder %s21, 1
      %p82 = por %p80, %p81
      %p84 = scmp.ne.s32.totalorder %s67, %s83
      %p85 = scmp.eq.s32.totalorder %s21, 0
      %p86 = por %p84, %p85
      %s87 = ssub.s32 %s23, %s30
      %p88 = scmp.eq.s32.totalorder %s87, 0
      %s90 = sadd.s32 %s89, 1
      %s91 = scalar_select %p88, %s89, %s90
      %p94 = pneg %p88
      %p95 = scmp.eq.s32.totalorder %s15, 1
      %p96 = por %p94, %p95
      %p97 = scmp.ne.s32.totalorder %s89, %s92
      %p98 = scmp.eq.s32.totalorder %s15, 0
      %p99 = por %p97, %p98
      %p100 = scmp.ne.s32.totalorder %s89, %s92
      %p101 = scmp.eq.s32.totalorder %s20, 1
      %p102 = por %p100, %p101
      %p103 = scmp.ne.s32.totalorder %s92, %s93
      %p104 = scmp.eq.s32.totalorder %s20, 0
      %p105 = por %p103, %p104
      %p106 = scmp.ne.s32.totalorder %s92, %s93
      %p107 = scmp.eq.s32.totalorder %s21, 1
      %p108 = por %p106, %p107
      %p110 = scmp.ne.s32.totalorder %s93, %s109
      %p111 = scmp.eq.s32.totalorder %s21, 0
      %p112 = por %p110, %p111
      %s113 = ssub.s32 %s22, %s34
      %s114 = ssub.s32 %s23, %s30
      %s115 = sor.u32 %s113, %s114
      %p116 = scmp.eq.s32.totalorder %s115, 0
      %s118 = sadd.s32 %s117, 1
      %s119 = scalar_select %p116, %s117, %s118
      %p122 = pneg %p116
      %p123 = scmp.eq.s32.totalorder %s15, 1
      %p124 = por %p122, %p123
      %p125 = scmp.ne.s32.totalorder %s117, %s120
      %p126 = scmp.eq.s32.totalorder %s15, 0
      %p127 = por %p125, %p126
      %p128 = scmp.ne.s32.totalorder %s117, %s120
      %p129 = scmp.eq.s32.totalorder %s20, 1
      %p130 = por %p128, %p129
      %p131 = scmp.ne.s32.totalorder %s120, %s121
      %p132 = scmp.eq.s32.totalorder %s20, 0
      %p133 = por %p131, %p132
      %p134 = scmp.ne.s32.totalorder %s120, %s121
      %p135 = scmp.eq.s32.totalorder %s21, 1
      %p136 = por %p134, %p135
      %p138 = scmp.ne.s32.totalorder %s121, %s137
      %p139 = scmp.eq.s32.totalorder %s21, 0
      %p140 = por %p138, %p139
      %p141 = scmp.le.s32.totalorder 1, %s15
      %p142 = scmp.lt.s32.totalorder %s15, 3
      %p143 = pnand %p141, %p142
      %p144 = pneg %p143
      // Predicated region
      $region9: #{tpu_custom_call.1} parent=5 // pred_check
        _
      $region10: #{tpu_custom_call.1} parent=5 // pred_check_branch
        %146 = sbr.rel (%p143) target = $region12
      $region11: #{tpu_custom_call.1} parent=5 // pred_region
        %s147 = ssub.s32 %s15, 1
        // Predicated region
        $region13: #{tpu_custom_call.1} parent=11 // pred_check
          %p148 = pneg %p79
        $region14: #{tpu_custom_call.1} parent=11 // pred_check_branch
          %150 = sbr.rel (%p148) target = $region16
        $region15: #{tpu_custom_call.1} parent=11 // pred_region
          %p151 = scmp.lt.s32.totalorder %s25, 0
          %s152 = scalar_select %p151, %s25, 0
          %s153 = smul.addr %s152, 8
          %s154 = scalar_lea.vmem %s1, %s153
        $region16: #{tpu_custom_call.1} parent=11 // pred_fallthru
          _
        // Predicated region
        $region17: #{tpu_custom_call.1} parent=11 // pred_check
          %p155 = pneg %p105
        $region18: #{tpu_custom_call.1} parent=11 // pred_check_branch
          %157 = sbr.rel (%p155) target = $region20
        $region19: #{tpu_custom_call.1} parent=11 // pred_region
          %p158 = scmp.lt.s32.totalorder %s25, 0
          %s159 = scalar_select %p158, %s25, 0
          %s160 = smul.addr %s159, 8
          %s161 = scalar_lea.vmem %s2, %s160
        $region20: #{tpu_custom_call.1} parent=11 // pred_fallthru
          _
      $region12: #{tpu_custom_call.1} parent=5 // pred_fallthru
        _
      %p162 = scmp.lt.s32.totalorder %s15, 2
      // Predicated region
      $region21: #{tpu_custom_call.1} parent=5 // pred_check
        %p163 = pneg %p162
      $region22: #{tpu_custom_call.1} parent=5 // pred_check_branch
        %165 = sbr.rel (%p163) target = $region24
      $region23: #{tpu_custom_call.1} parent=5 // pred_region
        // Predicated region
        $region25: #{tpu_custom_call.1} parent=23 // pred_check
          %p166 = pneg %p47
        $region26: #{tpu_custom_call.1} parent=23 // pred_check_branch
          %168 = sbr.rel (%p166) target = $region28
        $region27: #{tpu_custom_call.1} parent=23 // pred_region
          %s169 = sand.u32 %s37, 1
          %s170 = scalar_lea.sflag [#allocation4], %s169
          %s171 = sand.u32 %s37, 1
          %s172 = smul.addr %s171, 12
          %s173 = scalar_lea.vmem [#allocation3], %s172
          %175 = vsyncadd %s170, 0
          %s176 = smul.addr %s22, 3
          %s177 = smul.addr %s176, 4
          %s178 = scalar_lea.hbm %s0, %s177
          %s180 = sshll.u32 %s178, 4
          %s181 = int_to_ptr.hbm [resolvable:$true] %s180
          %s182 = sshll.u32 %s173, 4
          %s183 = int_to_ptr.vmem [resolvable:$true] %s182
          %185 = dma.hbm_to_vmem [thread:$0]  %s181, 192, %s183, %s170
        $region28: #{tpu_custom_call.1} parent=23 // pred_fallthru
          _
      $region24: #{tpu_custom_call.1} parent=5 // pred_fallthru
        _
      %p186 = scmp.le.s32.totalorder 1, %s15
      %p187 = scmp.lt.s32.totalorder %s15, 3
      %p188 = pnand %p186, %p187
      %p189 = pneg %p188
      // Predicated region
      $region29: #{tpu_custom_call.1} parent=5 // pred_check
        _
      $region30: #{tpu_custom_call.1} parent=5 // pred_check_branch
        %191 = sbr.rel (%p188) target = $region32
      $region31: #{tpu_custom_call.1} parent=5 // pred_region
        %s192 = ssub.s32 %s15, 1
        %s193 = sand.u32 %s40, 1
        %s194 = scalar_lea.sflag [#allocation4], %s193
        %s195 = sand.u32 %s40, 1
        %s196 = smul.addr %s195, 12
        %s197 = scalar_lea.vmem [#allocation3], %s196
        // Predicated region
        $region33: #{tpu_custom_call.1} parent=31 // pred_check
          %p198 = pneg %p53
        $region34: #{tpu_custom_call.1} parent=31 // pred_check_branch
          %200 = sbr.rel (%p198) target = $region36
        $region35: #{tpu_custom_call.1} parent=31 // pred_region
          %202 = dma.done %s194, 192
        $region36: #{tpu_custom_call.1} parent=31 // pred_fallthru
          _
        %s203 = sand.u32 %s40, 1
        %s204 = scalar_lea.sflag [#allocation4], %s203
        %s205 = sand.u32 %s40, 1
        %s206 = smul.addr %s205, 12
        %s207 = scalar_lea.vmem [#allocation3], %s206
        %p208 = pneg %p53
        %p209 = pneg %p50
        %p210 = scmp.lt.s32.totalorder %s25, 0
        %s211 = scalar_select %p210, %s25, 0
        %s212 = smul.addr %s211, 8
        %s213 = scalar_lea.vmem %s1, %s212
        %p214 = pneg %p79
        %p215 = pneg %p76
        %p216 = scmp.lt.s32.totalorder %s25, 0
        %s217 = scalar_select %p216, %s25, 0
        %s218 = smul.addr %s217, 8
        %s219 = scalar_lea.vmem %s2, %s218
        %p220 = pneg %p105
        %p221 = pneg %p102
        %p222 = pneg %p133
        %p223 = pneg %p130
        %s224 = sand.u32 %s120, 1
        %s225 = scalar_lea.sflag [#allocation5], %s224
        %s226 = sand.u32 %s120, 1
        %s227 = smul.addr %s226, 24
        %s228 = scalar_lea.vmem [#allocation6], %s227
        %p229 = scmp.lt.s32.totalorder %s25, 0
        %s230 = scalar_select %p229, %s25, 0
        %s231 = smul.addr %s230, 8
        %s232 = scalar_lea.vmem %s1, %s231
        %p233 = scmp.lt.s32.totalorder %s25, 0
        %s234 = scalar_select %p233, %s25, 0
        %s235 = smul.addr %s234, 8
        %s236 = scalar_lea.vmem %s2, %s235
        %v237 = vld [vmem:[%s197] sm:$0xff]
        %v238 = vld [vmem:[%s197 + $0x8] sm:$0xf]
        %v239 = vmul.f32 %v237, 65536.0
        %v240 = vmul.f32 %v238, 65536.0
        %v241 = vfloor.f32 %v239
        %v242 = vfloor.f32 %v240
        %v243 = vmul.f32 %v241, 1.5258789e-05
        %v244 = vmul.f32 %v242, 1.5258789e-05
        %v245 = vmax.f32 %v243, -32768.0
        %v246 = vmax.f32 %v244, -32768.0
        %v247 = vmin.f32 %v245, 32767.0
        %v248 = vmin.f32 %v246, 32767.0
        %251 = vst [vmem:[#allocation1] ss:$2 sm:$0xff] %v247
        %s252 = scalar_lea.vmem [#allocation1], 16
        %253 = vst [vmem:[%s252] ss:$2 sm:$0xff] %v248
        %v254 = vld.sshfl [vmem:[#allocation1] sm:$0xff pattern:$0x75316420]
        %v255 = vld.sshfl [vmem:[#allocation1 + $0x8] sm:$0xff pattern:$0x75316420]
        %v256 = vld.sshfl [vmem:[#allocation1 + $0x10] sm:$0xff pattern:$0x75316420]
        %260 = vst [vmem:[#allocation2] sm:$0xf] %v254
        %261 = vst [vmem:[#allocation2 + $0x8] sm:$0xf] %v255
        %vm262 = vcmask 257024
        %263 = vst.msk [vmem:[#allocation2 + $0x10] sm:$0xf] %vm262, %v256
        %s264 = scalar_lea.vmem [#allocation1], 1
        %265 = vst [vmem:[%s264] ss:$2 sm:$0xff] %v247
        %s266 = scalar_lea.vmem [#allocation1], 17
        %267 = vst [vmem:[%s266] ss:$2 sm:$0xff] %v248
        %v268 = vld.sshfl [vmem:[#allocation1] sm:$0xff pattern:$0x75316420]
        %v269 = vld.sshfl [vmem:[#allocation1 + $0x8] sm:$0xff pattern:$0x75316420]
        %v270 = vld.sshfl [vmem:[#allocation1 + $0x10] sm:$0xff pattern:$0x75316420]
        %271 = vrot.lane.b32.xlu0 %v268, 127
        %v272 = vpop.permute.xlu0 %271
        %273 = vrot.lane.b32.xlu0 %v269, 127
        %v274 = vpop.permute.xlu0 %273
        %275 = vrot.lane.b32.xlu0 %v270, 127
        %v276 = vpop.permute.xlu0 %275
        %vm277 = vcmask 1039360
        %v278 = vsel %vm277, %v272, %v274
        %v279 = vsel %vm277, %v274, %v276
        %283 = vst [vmem:[#allocation2] sm:$0xf0] %v278
        %284 = vst [vmem:[#allocation2 + $0x8] sm:$0xf0] %v279
        %vm285 = vcmask 261124
        %286 = vst.msk [vmem:[#allocation2 + $0x10] sm:$0xf0] %vm285, %v276
        %287 = vst [vmem:[#allocation1] ss:$2 sm:$0xff] %v247
        %s288 = scalar_lea.vmem [#allocation1], 16
        %289 = vst [vmem:[%s288] ss:$2 sm:$0xff] %v248
        %v290 = vld.sshfl [vmem:[#allocation1] sm:$0xff pattern:$0x75316420]
        %v291 = vld.sshfl [vmem:[#allocation1 + $0x8] sm:$0xff pattern:$0x75316420]
        %v292 = vld.sshfl [vmem:[#allocation1 + $0x10] sm:$0xff pattern:$0x75316420]
        %293 = vrot.lane.b32.xlu0 %v290, 126
        %v294 = vpop.permute.xlu0 %293
        %295 = vrot.lane.b32.xlu0 %v291, 126
        %v296 = vpop.permute.xlu0 %295
        %297 = vrot.lane.b32.xlu0 %v292, 126
        %v298 = vpop.permute.xlu0 %297
        %vm299 = vcmask 1031168
        %v300 = vsel %vm299, %v294, %v296
        %v301 = vsel %vm299, %v296, %v298
        %305 = vst [vmem:[#allocation2 + $0x18] sm:$0xf] %v300
        %306 = vst [vmem:[#allocation2 + $0x20] sm:$0xf] %v301
        %307 = vst.msk [vmem:[#allocation2 + $0x28] sm:$0xf] %vm262, %v298
        %s308 = scalar_lea.vmem [#allocation1], 1
        %309 = vst [vmem:[%s308] ss:$2 sm:$0xff] %v247
        %s310 = scalar_lea.vmem [#allocation1], 17
        %311 = vst [vmem:[%s310] ss:$2 sm:$0xff] %v248
        %v312 = vld.sshfl [vmem:[#allocation1] sm:$0xff pattern:$0x75316420]
        %v313 = vld.sshfl [vmem:[#allocation1 + $0x8] sm:$0xff pattern:$0x75316420]
        %v314 = vld.sshfl [vmem:[#allocation1 + $0x10] sm:$0xff pattern:$0x75316420]
        %315 = vrot.lane.b32.xlu0 %v312, 110
        %v316 = vpop.permute.xlu0 %315
        %317 = vrot.lane.b32.xlu0 %v313, 110
        %v318 = vpop.permute.xlu0 %317
        %319 = vrot.lane.b32.xlu0 %v314, 110
        %v320 = vpop.permute.xlu0 %319
        %vm321 = vcmask 900096
        %v322 = vsel %vm321, %v316, %v318
        %v323 = vsel %vm321, %v318, %v320
        %327 = vst [vmem:[#allocation2 + $0x18] sm:$0xf0] %v322
        %328 = vst [vmem:[#allocation2 + $0x20] sm:$0xf0] %v323
        %329 = vst.msk [vmem:[#allocation2 + $0x28] sm:$0xf0] %vm285, %v320
        %330 = vst [vmem:[#allocation1] ss:$2 sm:$0xff] %v247
        %s331 = scalar_lea.vmem [#allocation1], 16
        %332 = vst [vmem:[%s331] ss:$2 sm:$0xff] %v248
        %v333 = vld.sshfl [vmem:[#allocation1] sm:$0xff pattern:$0x75316420]
        %v334 = vld.sshfl [vmem:[#allocation1 + $0x8] sm:$0xff pattern:$0x75316420]
        %v335 = vld.sshfl [vmem:[#allocation1 + $0x10] sm:$0xff pattern:$0x75316420]
        %336 = vrot.lane.b32.xlu0 %v333, 109
        %v337 = vpop.permute.xlu0 %336
        %338 = vrot.lane.b32.xlu0 %v334, 109
        %v339 = vpop.permute.xlu0 %338
        %340 = vrot.lane.b32.xlu0 %v335, 109
        %v341 = vpop.permute.xlu0 %340
        %vm342 = vcmask 891904
        %v343 = vsel %vm342, %v337, %v339
        %v344 = vsel %vm342, %v339, %v341
        %348 = vst [vmem:[#allocation2 + $0x30] sm:$0xf] %v343
        %349 = vst [vmem:[#allocation2 + $0x38] sm:$0xf] %v344
        %350 = vst.msk [vmem:[#allocation2 + $0x40] sm:$0xf] %vm262, %v341
        %s351 = scalar_lea.vmem [#allocation1], 1
        %352 = vst [vmem:[%s351] ss:$2 sm:$0xff] %v247
        %s353 = scalar_lea.vmem [#allocation1], 17
        %354 = vst [vmem:[%s353] ss:$2 sm:$0xff] %v248
        %v355 = vld.sshfl [vmem:[#allocation1] sm:$0xff pattern:$0x75316420]
        %v356 = vld.sshfl [vmem:[#allocation1 + $0x8] sm:$0xff pattern:$0x75316420]
        %v357 = vld.sshfl [vmem:[#allocation1 + $0x10] sm:$0xff pattern:$0x75316420]
        %358 = vrot.lane.b32.xlu0 %v355, 108
        %v359 = vpop.permute.xlu0 %358
        %360 = vrot.lane.b32.xlu0 %v356, 108
        %v361 = vpop.permute.xlu0 %360
        %362 = vrot.lane.b32.xlu0 %v357, 108
        %v363 = vpop.permute.xlu0 %362
        %vm364 = vcmask 883712
        %v365 = vsel %vm364, %v359, %v361
        %v366 = vsel %vm364, %v361, %v363
        %370 = vst [vmem:[#allocation2 + $0x30] sm:$0xf0] %v365
        %371 = vst [vmem:[#allocation2 + $0x38] sm:$0xf0] %v366
        %372 = vst.msk [vmem:[#allocation2 + $0x40] sm:$0xf0] %vm285, %v363
        %373 = vst [vmem:[#allocation1] ss:$2 sm:$0xff] %v247
        %s374 = scalar_lea.vmem [#allocation1], 16
        %375 = vst [vmem:[%s374] ss:$2 sm:$0xff] %v248
        %v376 = vld.sshfl [vmem:[#allocation1] sm:$0xff pattern:$0x75316420]
        %v377 = vld.sshfl [vmem:[#allocation1 + $0x8] sm:$0xff pattern:$0x75316420]
        %v378 = vld.sshfl [vmem:[#allocation1 + $0x10] sm:$0xff pattern:$0x75316420]
        %379 = vrot.lane.b32.xlu0 %v376, 92
        %v380 = vpop.permute.xlu0 %379
        %381 = vrot.lane.b32.xlu0 %v377, 92
        %v382 = vpop.permute.xlu0 %381
        %383 = vrot.lane.b32.xlu0 %v378, 92
        %v384 = vpop.permute.xlu0 %383
        %vm385 = vcmask 752640
        %v386 = vsel %vm385, %v380, %v382
        %v387 = vsel %vm385, %v382, %v384
        %391 = vst [vmem:[#allocation2 + $0x48] sm:$0xf] %v386
        %392 = vst [vmem:[#allocation2 + $0x50] sm:$0xf] %v387
        %393 = vst.msk [vmem:[#allocation2 + $0x58] sm:$0xf] %vm262, %v384
        %s394 = scalar_lea.vmem [#allocation1], 1
        %395 = vst [vmem:[%s394] ss:$2 sm:$0xff] %v247
        %s396 = scalar_lea.vmem [#allocation1], 17
        %397 = vst [vmem:[%s396] ss:$2 sm:$0xff] %v248
        %v398 = vld.sshfl [vmem:[#allocation1] sm:$0xff pattern:$0x75316420]
        %v399 = vld.sshfl [vmem:[#allocation1 + $0x8] sm:$0xff pattern:$0x75316420]
        %v400 = vld.sshfl [vmem:[#allocation1 + $0x10] sm:$0xff pattern:$0x75316420]
        %401 = vrot.lane.b32.xlu0 %v398, 91
        %v402 = vpop.permute.xlu0 %401
        %403 = vrot.lane.b32.xlu0 %v399, 91
        %v404 = vpop.permute.xlu0 %403
        %405 = vrot.lane.b32.xlu0 %v400, 91
        %v406 = vpop.permute.xlu0 %405
        %vm407 = vcmask 744448
        %v408 = vsel %vm407, %v402, %v404
        %v409 = vsel %vm407, %v404, %v406
        %413 = vst [vmem:[#allocation2 + $0x48] sm:$0xf0] %v408
        %414 = vst [vmem:[#allocation2 + $0x50] sm:$0xf0] %v409
        %415 = vst.msk [vmem:[#allocation2 + $0x58] sm:$0xf0] %vm285, %v406
        %416 = vst [vmem:[#allocation1] ss:$2 sm:$0xff] %v247
        %s417 = scalar_lea.vmem [#allocation1], 16
        %418 = vst [vmem:[%s417] ss:$2 sm:$0xff] %v248
        %v419 = vld.sshfl [vmem:[#allocation1] sm:$0xff pattern:$0x75316420]
        %v420 = vld.sshfl [vmem:[#allocation1 + $0x8] sm:$0xff pattern:$0x75316420]
        %v421 = vld.sshfl [vmem:[#allocation1 + $0x10] sm:$0xff pattern:$0x75316420]
        %422 = vrot.lane.b32.xlu0 %v419, 90
        %v423 = vpop.permute.xlu0 %422
        %424 = vrot.lane.b32.xlu0 %v420, 90
        %v425 = vpop.permute.xlu0 %424
        %426 = vrot.lane.b32.xlu0 %v421, 90
        %v427 = vpop.permute.xlu0 %426
        %vm428 = vcmask 736256
        %v429 = vsel %vm428, %v423, %v425
        %v430 = vsel %vm428, %v425, %v427
        %434 = vst [vmem:[#allocation2 + $0x60] sm:$0xf] %v429
        %435 = vst [vmem:[#allocation2 + $0x68] sm:$0xf] %v430
        %436 = vst.msk [vmem:[#allocation2 + $0x70] sm:$0xf] %vm262, %v427
        %v437 = vld [vmem:[%s232] sm:$0xff]
        %v438 = vld [vmem:[#allocation2] sm:$0xff]
        %v439 = vld [vmem:[#allocation2 + $0x8] sm:$0xff]
        %v440 = vld [vmem:[#allocation2 + $0x10] sm:$0xff]
        %v441 = vld [vmem:[#allocation2 + $0x18] sm:$0xff]
        %v442 = vld [vmem:[#allocation2 + $0x20] sm:$0xff]
        %v443 = vld [vmem:[#allocation2 + $0x28] sm:$0xff]
        %v444 = vld [vmem:[#allocation2 + $0x30] sm:$0xff]
        %v445 = vld [vmem:[#allocation2 + $0x38] sm:$0xff]
        %v446 = vld [vmem:[#allocation2 + $0x40] sm:$0xff]
        %v447 = vld [vmem:[#allocation2 + $0x48] sm:$0xff]
        %v448 = vld [vmem:[#allocation2 + $0x50] sm:$0xff]
        %v449 = vld [vmem:[#allocation2 + $0x58] sm:$0xff]
        %v450 = vld [vmem:[#allocation2 + $0x60] sm:$0xf]
        %v451 = vld [vmem:[#allocation2 + $0x68] sm:$0xf]
        %v452 = vld [vmem:[#allocation2 + $0x70] sm:$0xf]
        %v453 = vld [vmem:[%s236] sm:$0xff]
        %455 = vset.pattern.permute.xlu0 0
        %456 = vperm.xlu0 %455, %v453
        %v457 = vpop.permute.xlu0 %456
        %vm459 = vcmask 293888
        %v461 = vsel %vm459, %v437, 0
        %vm463 = vcmask 1043456
        %v465 = vsel %vm463, %v450, 0
        %v468 = vsel %vm463, %v451, 0
        %v471 = vsel %vm463, %v452, 0
        %473 = vmatpush.msra.mxu0 0.0
        %474 = vmatpush.msra.mxu0 0.0
        %475 = vmatpush.msra.mxu0 0.0
        %476 = vmatpush.msra.mxu0 0.0
        %477 = vmatpush.msra.mxu0 0.0
        %478 = vmatpush.msra.mxu0 0.0
        %479 = vmatpush.msra.mxu0 0.0
        %480 = vmatpush.msra.mxu0 0.0
        %481 = vmatpush.msra.mxu0 0.0
        %482 = vmatpush.msra.mxu0 0.0
        %483 = vmatpush.msra.mxu0 0.0
        %484 = vmatpush.msra.mxu0 %v465
        %485 = vmatpush.msra.mxu0 %v447
        %486 = vmatpush.msra.mxu0 %v444
        %487 = vmatpush.msra.mxu0 %v441
        %488 = vmatpush.msra.mxu0 %v438
        %489 = vmatmul.f32.gmra.mxu0 %v461
        %v490 = vpop.f32.mrf.mxu0
        %v491 = vadd.f32 %v457, %v490
        %492 = vdwg.mxu0
        %493 = vmatpush.msra.mxu0 0.0
        %494 = vmatpush.msra.mxu0 0.0
        %495 = vmatpush.msra.mxu0 0.0
        %496 = vmatpush.msra.mxu0 0.0
        %497 = vmatpush.msra.mxu0 0.0
        %498 = vmatpush.msra.mxu0 0.0
        %499 = vmatpush.msra.mxu0 0.0
        %500 = vmatpush.msra.mxu0 0.0
        %501 = vmatpush.msra.mxu0 0.0
        %502 = vmatpush.msra.mxu0 0.0
        %503 = vmatpush.msra.mxu0 0.0
        %504 = vmatpush.msra.mxu0 %v468
        %505 = vmatpush.msra.mxu0 %v448
        %506 = vmatpush.msra.mxu0 %v445
        %507 = vmatpush.msra.mxu0 %v442
        %508 = vmatpush.msra.mxu0 %v439
        %509 = vmatmul.f32.gmra.mxu0 %v461
        %v510 = vpop.f32.mrf.mxu0
        %v511 = vadd.f32 %v457, %v510
        %512 = vdwg.mxu0
        %513 = vmatpush.msra.mxu0 0.0
        %514 = vmatpush.msra.mxu0 0.0
        %515 = vmatpush.msra.mxu0 0.0
        %516 = vmatpush.msra.mxu0 0.0
        %517 = vmatpush.msra.mxu0 0.0
        %518 = vmatpush.msra.mxu0 0.0
        %519 = vmatpush.msra.mxu0 0.0
        %520 = vmatpush.msra.mxu0 0.0
        %521 = vmatpush.msra.mxu0 0.0
        %522 = vmatpush.msra.mxu0 0.0
        %523 = vmatpush.msra.mxu0 0.0
        %524 = vmatpush.msra.mxu0 %v471
        %525 = vmatpush.msra.mxu0 %v449
        %526 = vmatpush.msra.mxu0 %v446
        %527 = vmatpush.msra.mxu0 %v443
        %528 = vmatpush.msra.mxu0 %v440
        %529 = vmatmul.f32.gmra.mxu0 %v461
        %v530 = vpop.f32.mrf.mxu0
        %v531 = vadd.f32 %v457, %v530
        %532 = vdwg.mxu0
        %533 = vst [vmem:[%s228] sm:$0xff] %v491
        %534 = vst [vmem:[%s228 + $0x8] sm:$0xff] %v511
        %vm535 = vcmask 261120
        %536 = vst.msk [vmem:[%s228 + $0x10] sm:$0xff] %vm535, %v531
        %s537 = sand.u32 %s120, 1
        %s538 = scalar_lea.sflag [#allocation5], %s537
        %s539 = sand.u32 %s120, 1
        %s540 = smul.addr %s539, 24
        %s541 = scalar_lea.vmem [#allocation6], %s540
        // Predicated region
        $region37: #{tpu_custom_call.1} parent=31 // pred_check
          %p542 = pneg %p130
        $region38: #{tpu_custom_call.1} parent=31 // pred_check_branch
          %544 = sbr.rel (%p542) target = $region40
        $region39: #{tpu_custom_call.1} parent=31 // pred_region
          %546 = vsyncadd %s538, 0
          %s547 = smul.addr %s25, 3
          %s548 = smul.addr %s24, 3
          %s549 = sadd.s32 %s547, %s548
          %s550 = smul.addr %s549, 8
          %s551 = scalar_lea.hbm %s3, %s550
          %s553 = sshll.u32 %s541, 4
          %s554 = int_to_ptr.vmem [resolvable:$true] %s553
          %s555 = sshll.u32 %s551, 4
          %s556 = int_to_ptr.hbm [resolvable:$true] %s555
          %558 = dma.vmem_to_hbm [thread:$0]  %s554, 384, %s556, %s538
        $region40: #{tpu_custom_call.1} parent=31 // pred_fallthru
          _
      $region32: #{tpu_custom_call.1} parent=5 // pred_fallthru
        _
      %p559 = scmp.le.s32.totalorder 2, %s15
      // Predicated region
      $region41: #{tpu_custom_call.1} parent=5 // pred_check
        %p560 = pneg %p559
      $region42: #{tpu_custom_call.1} parent=5 // pred_check_branch
        %562 = sbr.rel (%p560) target = $region44
      $region43: #{tpu_custom_call.1} parent=5 // pred_region
        %s563 = ssub.s32 %s15, 2
        // Predicated region
        $region45: #{tpu_custom_call.1} parent=43 // pred_check
          %p564 = pneg %p136
        $region46: #{tpu_custom_call.1} parent=43 // pred_check_branch
          %566 = sbr.rel (%p564) target = $region48
        $region47: #{tpu_custom_call.1} parent=43 // pred_region
          %s567 = sand.u32 %s121, 1
          %s568 = scalar_lea.sflag [#allocation5], %s567
          %s569 = sand.u32 %s121, 1
          %s570 = smul.addr %s569, 24
          %s571 = scalar_lea.vmem [#allocation6], %s570
          %573 = dma.done %s568, 384
        $region48: #{tpu_custom_call.1} parent=43 // pred_fallthru
          _
      $region44: #{tpu_custom_call.1} parent=5 // pred_fallthru
        _
    $region6: #{tpu_custom_call.1} parent=1 // loop_footer
      %s19 = sadd.s32 1, %s15
    $region7: #{tpu_custom_call.1} parent=1 // loop_footer_branch
      %14 = sbr.rel target = $region3
    $region8: #{tpu_custom_call.1} parent=1 // loop_exit
      _
    %574 = vsyncpa [#allocation4], 1
    %s575 = scalar_lea.sflag [#allocation4], 1
    %576 = vsyncpa %s575, 1
    %577 = vsyncpa [#allocation5], 1
    %s578 = scalar_lea.sflag [#allocation5], 1
    %579 = vsyncpa %s578, 1

</llo_original>
